<compile_context>
chip_gen: v5e
topology: v5e:2x2
jax: 0.10.0
libtpu: 0.0.40
codegen_flags: <defaults>
</compile_context>

<pallas_src>
import functools

import jax
import jax.numpy as jnp
from jax import lax
from jax.experimental import pallas as pl
from jax.experimental.pallas import tpu as pltpu


def _round_up(x, m):
    return (x + m - 1) // m * m


@functools.lru_cache(maxsize=None)
def _make_mlp_kernel(num_layers, has_bias):
    """Fused (Linear [+bias] [+ReLU])*L kernel over one M tile."""

    def kernel(*refs):
        # refs = (x_ref, w_0..w_{L-1}, [b_0..b_{L-1}], o_ref)
        x_ref = refs[0]
        w_refs = refs[1:1 + num_layers]
        b_refs = refs[1 + num_layers:1 + 2 * num_layers] if has_bias else None
        o_ref = refs[-1]

        y = x_ref[...]
        for l in range(num_layers):
            # y @ W_l.T : contract last dims of both (PyTorch (out, in) weight layout),
            # f32 MXU accumulation.
            y = lax.dot_general(
                y,
                w_refs[l][...],
                dimension_numbers=(((1,), (1,)), ((), ())),
                preferred_element_type=jnp.float32,
            )
            if has_bias:
                y = y + b_refs[l][...].astype(jnp.float32)
            if l < num_layers - 1:
                # ReLU between layers; cast back to the activation dtype to match the
                # per-layer dtype chaining of the PyTorch module.
                y = jnp.maximum(y, 0.0).astype(x_ref.dtype)
        o_ref[...] = y.astype(o_ref.dtype)

    return kernel


def query_mlp_forward(
    x,
    weights,
    biases=None,
    *,
    heads,
    k_dim,
    tile_m=512,
    vmem_budget_bytes=36 * 1024 * 1024,
):
    """QueryMLP forward.

    x: (..., input_dim)
    weights: a single PyTorch-layout (out, in) weight, or a list of them (MLP chain).
    biases: optional list of per-layer (out,) biases (module's bias=True case).
    Returns (prod(x.shape[:-1]) * heads, k_dim).
    """
    if hasattr(weights, "ndim"):
        weights = [weights]
    weights = list(weights)
    num_layers = len(weights)
    has_bias = biases is not None
    if has_bias:
        biases = list(biases)
        assert len(biases) == num_layers

    input_dim = x.shape[-1]
    n_out = heads * k_dim
    assert weights[0].shape[1] == input_dim
    assert weights[-1].shape[0] == n_out
    for l in range(1, num_layers):
        assert weights[l].shape[1] == weights[l - 1].shape[0]

    # torch: input.contiguous().view(-1, input_dim)
    x2d = x.reshape(-1, input_dim)
    bs = x2d.shape[0]

    # Lane-dense feature dims: every layer's out dim padded to a multiple of 128.
    out_pads = [_round_up(w.shape[0], 128) for w in weights]
    in_pads = [input_dim] + out_pads[:-1]
    n_last_pad = out_pads[-1]

    # TODO(synk): in production, pad/cache the padded weights once at init time
    #             instead of in the per-call path.
    w_p = []
    for l, w in enumerate(weights):
        pad_r = out_pads[l] - w.shape[0]
        pad_c = in_pads[l] - w.shape[1]
        w_p.append(jnp.pad(w, ((0, pad_r), (0, pad_c))) if (pad_r or pad_c) else w)
    b_p = []
    if has_bias:
        for l, b in enumerate(biases):
            bp = b.reshape(1, -1)
            pad_c = out_pads[l] - bp.shape[1]
            b_p.append(jnp.pad(bp, ((0, 0), (0, pad_c))) if pad_c else bp)

    itemsize = jnp.dtype(x.dtype).itemsize

    # VMEM-budgeted M tile: weights/biases resident (budget 2x for buffer headroom),
    # x / out blocks double-buffered, intermediate activations in f32.
    fixed_bytes = sum(2 * int(w.size) * jnp.dtype(w.dtype).itemsize for w in w_p)
    if has_bias:
        fixed_bytes += sum(2 * int(b.size) * jnp.dtype(b.dtype).itemsize for b in b_p)
    per_row_bytes = 2 * (input_dim + n_last_pad) * itemsize + sum(out_pads[:-1]) * 4
    budget_rows = max(8, (vmem_budget_bytes - fixed_bytes) // max(per_row_bytes, 1))
    tm = min(max(tile_m // 8 * 8, 8), _round_up(bs, 8), max(budget_rows // 8 * 8, 8))
    m_pad = _round_up(bs, tm)

    if m_pad != bs:
        x2d = jnp.pad(x2d, ((0, m_pad - bs), (0, 0)))

    grid = (m_pad // tm,)

    in_specs = [pl.BlockSpec((tm, input_dim), lambda i: (i, 0))]
    for l in range(num_layers):
        in_specs.append(pl.BlockSpec((out_pads[l], in_pads[l]), lambda i: (0, 0)))
    if has_bias:
        for l in range(num_layers):
            in_specs.append(pl.BlockSpec((1, out_pads[l]), lambda i: (0, 0)))

    flops = sum(2 * m_pad * in_pads[l] * out_pads[l] for l in range(num_layers))
    bytes_accessed = (
        m_pad * input_dim * itemsize
        + sum(int(w.size) * jnp.dtype(w.dtype).itemsize for w in w_p)
        + (sum(int(b.size) * jnp.dtype(b.dtype).itemsize for b in b_p) if has_bias else 0)
        + m_pad * n_last_pad * itemsize
    )

    kernel = _make_mlp_kernel(num_layers, has_bias)

    out = pl.pallas_call(
        kernel,
        out_shape=jax.ShapeDtypeStruct((m_pad, n_last_pad), x.dtype),
        grid_spec=pltpu.PrefetchScalarGridSpec(
            num_scalar_prefetch=0,
            grid=grid,
            in_specs=in_specs,
            out_specs=pl.BlockSpec((tm, n_last_pad), lambda i: (i, 0)),
        ),
        compiler_params=pltpu.CompilerParams(
            dimension_semantics=("parallel",),
            vmem_limit_bytes=48 * 1024 * 1024,
        ),
        cost_estimate=pl.CostEstimate(
            flops=flops, bytes_accessed=bytes_accessed, transcendentals=0
        ),
    )(x2d, *w_p, *(b_p if has_bias else []))

    # Strip padding, then torch: query.view(bs * heads, k_dim)
    out = out[:bs, :n_out]
    return out.reshape(bs * heads, k_dim)


if __name__ == "__main__":
    # Small, module-consistent shapes.
    input_dim, heads, k_dim = 32, 4, 16
    n_out = heads * k_dim  # 64

    key = jax.random.PRNGKey(0)
    kx, kw, kx2, kw0, kw1, kb0, kb1 = jax.random.split(key, 7)

    # Deterministic init matching nn.Linear's default, PyTorch weight layout (out, in).
    bound = 1.0 / (input_dim ** 0.5)
    weight = jax.random.uniform(
        kw, (n_out, input_dim), minval=-bound, maxval=bound, dtype=jnp.float32
    )

    # Case 1: module defaults (sizes=(input_dim, heads*k_dim), bias=False) -> single
    # no-bias Linear. x: (batch=2, seq=8, input_dim) -> bs = 16.
    x = jax.random.normal(kx, (2, 8, input_dim), dtype=jnp.float32)
    q = jax.block_until_ready(query_mlp_forward(x, weight, heads=heads, k_dim=k_dim))
    ref = (x.reshape(-1, input_dim) @ weight.T).reshape(-1, k_dim)
    assert q.shape == (2 * 8 * heads, k_dim)
    assert jnp.allclose(q, ref, atol=1e-5, rtol=1e-5)

    # Case 2: ragged bs (=21, not a multiple of 8) -> exercises M padding + slicing.
    x2 = jax.random.normal(kx2, (3, 7, input_dim), dtype=jnp.float32)
    q2 = jax.block_until_ready(query_mlp_forward(x2, weight, heads=heads, k_dim=k_dim))
    ref2 = (x2.reshape(-1, input_dim) @ weight.T).reshape(-1, k_dim)
    assert q2.shape == (3 * 7 * heads, k_dim)
    assert jnp.allclose(q2, ref2, atol=1e-5, rtol=1e-5)

    # Case 3: force a multi-step pipelined grid (tile_m=8 -> grid of 2 over bs=16).
    q3 = jax.block_until_ready(
        query_mlp_forward(x, weight, heads=heads, k_dim=k_dim, tile_m=8)
    )
    assert jnp.allclose(q3, ref, atol=1e-5, rtol=1e-5)

    # Case 4: multi-layer MLP with bias (sizes=(32, 48, 64), bias=True):
    # Linear + ReLU + Linear fused into one kernel, weights VMEM-resident.
    hid = 48
    w0 = jax.random.uniform(kw0, (hid, input_dim), minval=-bound, maxval=bound,
                            dtype=jnp.float32)
    b0 = jax.random.uniform(kb0, (hid,), minval=-bound, maxval=bound, dtype=jnp.float32)
    bound1 = 1.0 / (hid ** 0.5)
    w1 = jax.random.uniform(kw1, (n_out, hid), minval=-bound1, maxval=bound1,
                            dtype=jnp.float32)
    b1 = jax.random.uniform(kb1, (n_out,), minval=-bound1, maxval=bound1,
                            dtype=jnp.float32)
    q4 = jax.block_until_ready(
        query_mlp_forward(x, [w0, w1], [b0, b1], heads=heads, k_dim=k_dim)
    )
    h = jnp.maximum(x.reshape(-1, input_dim) @ w0.T + b0, 0.0)
    ref4 = (h @ w1.T + b1).reshape(-1, k_dim)
    assert q4.shape == (2 * 8 * heads, k_dim)
    assert jnp.allclose(q4, ref4, atol=1e-5, rtol=1e-5)

    print("KERNEL_OK")
</pallas_src>

<mosaic_0001>
module attributes {stable_mosaic.version = 11 : i64} {
  func.func @kernel(%arg0: i32, %arg1: memref<16x32xf32, #tpu.memory_space<vmem>>, %arg2: memref<128x32xf32, #tpu.memory_space<vmem>>, %arg3: memref<16x128xf32, #tpu.memory_space<vmem>>) attributes {dimension_semantics = [#tpu.dimension_semantics<parallel>], iteration_bounds = array<i64: 1>, scalar_prefetch = 0 : i64, scratch_operands = 0 : i64, tpu.core_type = #tpu.core_type<tc>, window_params = [{transform_indices = @transform_0, window_bounds = array<i64: 16, 32>}, {pipeline_mode = #tpu.pipeline_mode<synchronous>, transform_indices = @transform_1, window_bounds = array<i64: 128, 32>}, {transform_indices = @transform_2, window_bounds = array<i64: 16, 128>}]} {
    %c0 = arith.constant 0 : index
    %c0_0 = arith.constant 0 : index
    %0 = vector.load %arg1[%c0, %c0_0] : memref<16x32xf32, #tpu.memory_space<vmem>>, vector<16x32xf32>
    %c0_1 = arith.constant 0 : index
    %c0_2 = arith.constant 0 : index
    %1 = vector.load %arg2[%c0_1, %c0_2] : memref<128x32xf32, #tpu.memory_space<vmem>>, vector<128x32xf32>
    %cst = arith.constant dense<0.000000e+00> : vector<16x128xf32>
    %2 = tpu.matmul %0, %1, %cst {dimension_numbers = #tpu.dot_dimension_numbers<[1], [1], [0], [0], [0, 0, 1, 0], [], []>} : vector<16x32xf32>, vector<128x32xf32>, vector<16x128xf32> -> vector<16x128xf32>
    %c0_3 = arith.constant 0 : index
    %c0_4 = arith.constant 0 : index
    %3 = vector.load %arg3[%c0_3, %c0_4] : memref<16x128xf32, #tpu.memory_space<vmem>>, vector<16x128xf32>
    tpu.vector_store %arg3[%c0_3, %c0_4], %2 {strides = array<i32>} : memref<16x128xf32, #tpu.memory_space<vmem>>, vector<16x128xf32>,
    return
  }
  func.func @transform_0(%arg0: i32) -> (i32, i32) {
    %c0_i32 = arith.constant 0 : i32
    %c0_i32_0 = arith.constant 0 : i32
    return %arg0, %c0_i32 : i32, i32
  }
  func.func @transform_1(%arg0: i32) -> (i32, i32) {
    %c0_i32 = arith.constant 0 : i32
    %c0_i32_0 = arith.constant 0 : i32
    %c0_i32_1 = arith.constant 0 : i32
    return %c0_i32, %c0_i32_0 : i32, i32
  }
  func.func @transform_2(%arg0: i32) -> (i32, i32) {
    %c0_i32 = arith.constant 0 : i32
    %c0_i32_0 = arith.constant 0 : i32
    return %arg0, %c0_i32 : i32, i32
  }
}

</mosaic_0001>

<llo_original>
// kernel: tpu_custom_call.1
$region0: #{tpu_custom_call.1}
  #allocation0 [shape = 'u32[]', space=smem, size = 0x4, offset = 0x4, fixed_abs, tag = 'smem constant byte address 0x4 - core index']
  #allocation1 [shape = 'u32[72,128]{1,0:T(1,128)}', space=vmem, size = 0x9000, scoped, tag = 'internal scratch']
  %s0 = inlined_call_operand.vmem [shape: f32[16,32], index: 0, kind: input, shape index: {}]
  %s1 = inlined_call_operand.vmem [shape: f32[128,32], index: 1, kind: input, shape index: {}]
  %s2 = inlined_call_operand.hbm [shape: f32[16,128], index: 2, kind: output, shape index: {}]
  %s3 = sld [smem:[#allocation0]]
  $region18: #{tpu_custom_call.1} parent=0
    _
  %s5 = ssub.s32 1, %s3
  %s6 = scalar_select 0, %s5, %s3
  $region1: #{tpu_custom_call.1} parent=0
    #allocation2 [shape = 'u8[8192]{0}', space=vmem, size = 0x2000, scoped, tag = 'output window, operand 0, single buffered']
    #allocation3 [shape = 's32[1]{0}', space=sflag, size = 0x4, scoped, tag = 'scoped memory for tpu_custom_call.1']
    %7 = vsyncpa [#allocation3], 0
    // Predicated region
    $region2: #{tpu_custom_call.1} parent=1 // pred_check
      _
    $region3: #{tpu_custom_call.1} parent=1 // pred_check_branch
      %9 = sbr.rel (0) target = $region5
    $region4: #{tpu_custom_call.1} parent=1 // pred_region
      _
    $region5: #{tpu_custom_call.1} parent=1 // pred_fallthru
      _
    // Predicated region
    $region6: #{tpu_custom_call.1} parent=1 // pred_check
      _
    $region7: #{tpu_custom_call.1} parent=1 // pred_check_branch
      %11 = sbr.rel (0) target = $region9
    $region8: #{tpu_custom_call.1} parent=1 // pred_region
      _
    $region9: #{tpu_custom_call.1} parent=1 // pred_fallthru
      _
    %v12 = vld [vmem:[%s0] sm:$0xff]
    %v13 = vld [vmem:[%s0 + $0x8] sm:$0xff]
    %v14 = vld [vmem:[%s1] sm:$0xff]
    %v15 = vld [vmem:[%s1 + $0x8] sm:$0xff]
    %v16 = vld [vmem:[%s1 + $0x10] sm:$0xff]
    %v17 = vld [vmem:[%s1 + $0x18] sm:$0xff]
    %v18 = vld [vmem:[%s1 + $0x20] sm:$0xff]
    %v19 = vld [vmem:[%s1 + $0x28] sm:$0xff]
    %v20 = vld [vmem:[%s1 + $0x30] sm:$0xff]
    %v21 = vld [vmem:[%s1 + $0x38] sm:$0xff]
    %v22 = vld [vmem:[%s1 + $0x40] sm:$0xff]
    %v23 = vld [vmem:[%s1 + $0x48] sm:$0xff]
    %v24 = vld [vmem:[%s1 + $0x50] sm:$0xff]
    %v25 = vld [vmem:[%s1 + $0x58] sm:$0xff]
    %v26 = vld [vmem:[%s1 + $0x60] sm:$0xff]
    %v27 = vld [vmem:[%s1 + $0x68] sm:$0xff]
    %v28 = vld [vmem:[%s1 + $0x70] sm:$0xff]
    %v29 = vld [vmem:[%s1 + $0x78] sm:$0xff]
    %vm30 = vcmask 261120
    %v32 = vsel %vm30, %v12, 0
    %v35 = vsel %vm30, %v13, 0
    %v38 = vsel %vm30, %v14, 0
    %v41 = vsel %vm30, %v15, 0
    %v44 = vsel %vm30, %v16, 0
    %v47 = vsel %vm30, %v17, 0
    %v50 = vsel %vm30, %v18, 0
    %v53 = vsel %vm30, %v19, 0
    %v56 = vsel %vm30, %v20, 0
    %v59 = vsel %vm30, %v21, 0
    %v62 = vsel %vm30, %v22, 0
    %v65 = vsel %vm30, %v23, 0
    %v68 = vsel %vm30, %v24, 0
    %v71 = vsel %vm30, %v25, 0
    %v74 = vsel %vm30, %v26, 0
    %v77 = vsel %vm30, %v27, 0
    %v80 = vsel %vm30, %v28, 0
    %v83 = vsel %vm30, %v29, 0
    %85 = vmatpush.xpose.msra.mxu0 %v83
    %86 = vmatpush.xpose.msra.mxu0 %v80
    %87 = vmatpush.xpose.msra.mxu0 %v77
    %88 = vmatpush.xpose.msra.mxu0 %v74
    %89 = vmatpush.xpose.msra.mxu0 %v71
    %90 = vmatpush.xpose.msra.mxu0 %v68
    %91 = vmatpush.xpose.msra.mxu0 %v65
    %92 = vmatpush.xpose.msra.mxu0 %v62
    %93 = vmatpush.xpose.msra.mxu0 %v59
    %94 = vmatpush.xpose.msra.mxu0 %v56
    %95 = vmatpush.xpose.msra.mxu0 %v53
    %96 = vmatpush.xpose.msra.mxu0 %v50
    %97 = vmatpush.xpose.msra.mxu0 %v47
    %98 = vmatpush.xpose.msra.mxu0 %v44
    %99 = vmatpush.xpose.msra.mxu0 %v41
    %100 = vmatpush.xpose.msra.mxu0 %v38
    %101 = vmatmul.f32.gmra.mxu0 %v32
    %v102 = vpop.f32.mrf.mxu0
    %v103 = vadd.f32 0.0, %v102
    %104 = vmatmul.f32.gmra.mxu0 %v35
    %v105 = vpop.f32.mrf.mxu0
    %v106 = vadd.f32 0.0, %v105
    %107 = vdwg.mxu0
    %108 = vst [vmem:[#allocation2] sm:$0xff] %v103
    %109 = vst [vmem:[#allocation2 + $0x8] sm:$0xff] %v106
    // Predicated region
    $region10: #{tpu_custom_call.1} parent=1 // pred_check
      _
    $region11: #{tpu_custom_call.1} parent=1 // pred_check_branch
      %111 = sbr.rel (0) target = $region13
    $region12: #{tpu_custom_call.1} parent=1 // pred_region
      %113 = vsyncadd [#allocation3], 0
      %s114 = sshll.u32 [#allocation2], 4
      %s115 = int_to_ptr.vmem [resolvable:$true] %s114
      %s116 = sshll.u32 %s2, 4
      %s117 = int_to_ptr.hbm [resolvable:$true] %s116
      %122 = dma.vmem_to_hbm [thread:$0]  %s115, 256, %s117, [#allocation3], 128, 128, 8
    $region13: #{tpu_custom_call.1} parent=1 // pred_fallthru
      _
    // Predicated region
    $region14: #{tpu_custom_call.1} parent=1 // pred_check
      _
    $region15: #{tpu_custom_call.1} parent=1 // pred_check_branch
      %124 = sbr.rel (0) target = $region17
    $region16: #{tpu_custom_call.1} parent=1 // pred_region
      %126 = dma.done [#allocation3], 256
    $region17: #{tpu_custom_call.1} parent=1 // pred_fallthru
      _
    %127 = vsyncpa [#allocation3], 1

</llo_original>
